<compile_context>
chip_gen: v7x
topology: tpu7x:2x2x1
jax: 0.10.0
libtpu: 0.0.40
codegen_flags: <defaults>
</compile_context>

<pallas_src>
import functools

import jax
import jax.numpy as jnp
from jax.experimental import pallas as pl
from jax.experimental.pallas import tpu as pltpu


def _round_up(n, m):
    return ((n + m - 1) // m) * m


def _spatial_projection_kernel(x_ref, wk_ref, bk_ref, red_ref, msk_ref,
                               wp_ref, bp_ref, o_ref, *, tb, c, k, hw):
    # x_ref:   (TB, C*HW)   batch tile, caller dtype (f32 or bf16), lane-dense
    # wk_ref:  (C, K, 1)    1x1-conv weight (f32, pre-scaled by 1/temperature)
    # bk_ref:  (K, 1)       1x1-conv bias   (f32, pre-scaled by 1/temperature)
    # red_ref: (HW, 3K)     reduction matrix: cols [ones]*K ++ [pos_x]*K ++ [pos_y]*K
    # msk_ref: (K, 3K)      one-hot selection mask (row k picks cols k, K+k, 2K+k)
    # wp_ref:  (2K, OUT)    projection weight, rows = [x_0..x_{K-1}, y_0..y_{K-1}]
    # bp_ref:  (1, OUT)     projection bias (f32)
    # o_ref:   (TB, OUT)    output tile (f32), written once per grid step
    fdt = jnp.float32

    # --- 1x1 conv: C broadcast-MACs on the VPU, f32 accumulation -------------
    acc = None
    for ci in range(c):                                  # static, C == 4
        xc = x_ref[:, pl.ds(ci * hw, hw)].astype(fdt)    # (TB, HW), 128-aligned
        term = xc[:, None, :] * wk_ref[ci][None]         # (TB,1,HW)*(1,K,1)->(TB,K,HW)
        acc = term if acc is None else acc + term
    feat = acc + bk_ref[...][None]                       # (TB, K, HW) f32
    feat2 = feat.reshape(tb * k, hw)                     # layout-free (K % 8 == 0)

    # --- spatial softmax, batched over all TB*K rows --------------------------
    m = jnp.max(feat2, axis=-1, keepdims=True)           # (TB*K, 1)
    p = jnp.exp(feat2 - m)                               # (TB*K, HW) unnormalized att

    # --- denom / E[x] / E[y] via one MXU matmul -------------------------------
    sums = jnp.dot(p, red_ref[...],
                   preferred_element_type=fdt)           # (TB*K, 3K)
    # Select each row's own keypoint column and land it in lanes:
    # sel[b, stat*K + k'] = stat-sum of sample b, keypoint k'.
    sums3 = sums.reshape(tb, k, 3 * k)                   # layout-free split
    sel = jnp.sum(sums3 * msk_ref[...][None], axis=1)    # (TB, 3K)

    denom = sel[:, 0:k]                                  # (TB, K)
    sx = sel[:, k:2 * k]
    sy = sel[:, 2 * k:3 * k]
    inv = 1.0 / denom                                    # tiny tile -> keep exact
    kp = jnp.concatenate([sx * inv, sy * inv], axis=-1)  # (TB, 2K): [x..., y...]

    # --- final linear projection: one (TB, 2K) @ (2K, OUT) MXU matmul ---------
    out = jnp.dot(kp, wp_ref[...], preferred_element_type=fdt) + bp_ref[...]
    o_ref[...] = out.astype(o_ref.dtype)                 # single full-block store


def spatial_projection_forward(x, wk, bk, Wp, bp, *, temperature=1.0,
                               block_b=64, vmem_limit_bytes=32 * 1024 * 1024):
    """x: [B, C, H, W]. Returns [B, out_dim] float32.

    wk: (K, C) 1x1-conv weight, bk: (K,) conv bias,
    Wp: (OUT, 2K) linear weight, bp: (OUT,) linear bias.
    """
    B, C, H, W = x.shape
    HW = H * W
    K = wk.shape[0]
    OUT = Wp.shape[0]

    # --- batch tiling: TB samples per grid step (sublane-aligned) -------------
    TB = min(block_b, _round_up(B, 8))
    TB = max(8, (TB // 8) * 8)
    B_pad = _round_up(B, TB)
    grid = (B_pad // TB,)

    # --- host-side glue: lane-dense x, constants, parameter reshapes ----------
    x_flat = x.reshape(B, C * HW)                 # contiguous reshape, keeps dtype
    if B_pad != B:
        x_flat = jnp.pad(x_flat, ((0, B_pad - B), (0, 0)))

    inv_t = 1.0 / float(temperature)
    wk3 = (wk.T.astype(jnp.float32) * inv_t).reshape(C, K, 1)   # (C, K, 1)
    bk3 = (bk.astype(jnp.float32) * inv_t).reshape(K, 1)        # (K, 1)

    xs = jnp.linspace(-1.0, 1.0, W, dtype=jnp.float32)
    ys = jnp.linspace(-1.0, 1.0, H, dtype=jnp.float32)
    pos_x, pos_y = jnp.meshgrid(xs, ys)           # 'xy' indexing, matches numpy
    pos_x = pos_x.reshape(HW)
    pos_y = pos_y.reshape(HW)
    ones = jnp.ones((HW,), jnp.float32)
    red = jnp.concatenate(
        [jnp.broadcast_to(v[:, None], (HW, K)) for v in (ones, pos_x, pos_y)],
        axis=1)                                   # (HW, 3K)
    eye = jnp.eye(K, dtype=jnp.float32)
    msk = jnp.concatenate([eye, eye, eye], axis=1)  # (K, 3K)

    # Linear weight acts on [x0,y0,x1,y1,...]; split by parity -> [x..., y...] rows.
    wp_xy = jnp.concatenate([Wp[:, 0::2], Wp[:, 1::2]], axis=1).T.astype(jnp.float32)
    bp2 = bp.reshape(1, OUT).astype(jnp.float32)

    kernel = functools.partial(_spatial_projection_kernel,
                               tb=TB, c=C, k=K, hw=HW)

    out = pl.pallas_call(
        kernel,
        out_shape=jax.ShapeDtypeStruct((B_pad, OUT), jnp.float32),
        grid_spec=pltpu.PrefetchScalarGridSpec(
            num_scalar_prefetch=0,
            grid=grid,
            in_specs=[
                pl.BlockSpec((TB, C * HW), lambda b: (b, 0)),     # x batch tile
                pl.BlockSpec((C, K, 1), lambda b: (0, 0, 0)),     # conv weight
                pl.BlockSpec((K, 1), lambda b: (0, 0)),           # conv bias
                pl.BlockSpec((HW, 3 * K), lambda b: (0, 0)),      # reduction matrix
                pl.BlockSpec((K, 3 * K), lambda b: (0, 0)),       # one-hot mask
                pl.BlockSpec((2 * K, OUT), lambda b: (0, 0)),     # proj weight
                pl.BlockSpec((1, OUT), lambda b: (0, 0)),         # proj bias
            ],
            out_specs=pl.BlockSpec((TB, OUT), lambda b: (b, 0)),  # dense output tile
        ),
        compiler_params=pltpu.CompilerParams(
            dimension_semantics=("parallel",),
            vmem_limit_bytes=vmem_limit_bytes),
    )(x_flat, wk3, bk3, red, msk, wp_xy, bp2)

    return out[:B]


def spatial_projection_reference(x, wk, bk, Wp, bp, *, temperature=1.0):
    """Pure-JAX reference matching the PyTorch forward (eval mode), f32 math."""
    hi = jax.lax.Precision.HIGHEST
    B, C, H, W = x.shape
    HW = H * W
    K = wk.shape[0]
    xs = jnp.linspace(-1.0, 1.0, W, dtype=jnp.float32)
    ys = jnp.linspace(-1.0, 1.0, H, dtype=jnp.float32)
    pos_x, pos_y = jnp.meshgrid(xs, ys)
    pos = jnp.stack([pos_x.reshape(-1), pos_y.reshape(-1)], axis=-1)   # (HW, 2)

    feat = jnp.einsum('kc,bcs->bks', wk, x.reshape(B, C, HW),
                      precision=hi) + bk[None, :, None]
    feat = feat.reshape(B * K, HW) / temperature
    att = jax.nn.softmax(feat, axis=-1)
    kp = jnp.dot(att, pos, precision=hi)            # (B*K, 2)
    kp_flat = kp.reshape(B, K * 2)                  # [x0,y0,x1,y1,...]
    return jnp.dot(kp_flat, Wp.T, precision=hi) + bp[None, :]


if __name__ == "__main__":
    # Small shapes consistent with the module: input (C,H,W)=(4,16,16), out_dim=32,
    # num_kp = out_dim // 2 = 16.
    B, C, H, W = 2, 4, 16, 16
    OUT = 32
    K = OUT // 2

    key = jax.random.PRNGKey(0)
    kx, kw1, kb1, kw2, kb2 = jax.random.split(key, 5)

    x = jax.random.normal(kx, (B, C, H, W), dtype=jnp.float32)

    # Deterministic parameter init (PyTorch-style uniform bounds).
    conv_bound = 1.0 / (C ** 0.5)                   # Conv2d(C, K, kernel_size=1)
    wk = jax.random.uniform(kw1, (K, C), jnp.float32, -conv_bound, conv_bound)
    bk = jax.random.uniform(kb1, (K,), jnp.float32, -conv_bound, conv_bound)

    lin_bound = 1.0 / ((2 * K) ** 0.5)              # Linear(2K, OUT)
    Wp = jax.random.uniform(kw2, (OUT, 2 * K), jnp.float32, -lin_bound, lin_bound)
    bp = jax.random.uniform(kb2, (OUT,), jnp.float32, -lin_bound, lin_bound)

    out = spatial_projection_forward(x, wk, bk, Wp, bp)
    out = jax.block_until_ready(out)

    ref = spatial_projection_reference(x, wk, bk, Wp, bp)
    assert out.shape == (B, OUT)
    # Tolerance sized to stay robust regardless of which f32 matmul pass-count
    # Mosaic picks for the two in-kernel MXU matmuls (with full-precision f32
    # passes the observed agreement is ~1e-6; a single bf16 pass would be ~1e-3).
    assert jnp.allclose(out, ref, atol=2e-3, rtol=2e-3), (out, ref)

    print("KERNEL_OK")
</pallas_src>

<mosaic_0001>
module attributes {stable_mosaic.version = 11 : i64} {
  func.func @_spatial_projection_kernel(%arg0: i32, %arg1: memref<8x1024xf32, #tpu.memory_space<vmem>>, %arg2: memref<4x16x1xf32, #tpu.memory_space<vmem>>, %arg3: memref<16x1xf32, #tpu.memory_space<vmem>>, %arg4: memref<256x48xf32, #tpu.memory_space<vmem>>, %arg5: memref<16x48xf32, #tpu.memory_space<vmem>>, %arg6: memref<32x32xf32, #tpu.memory_space<vmem>>, %arg7: memref<1x32xf32, #tpu.memory_space<vmem>>, %arg8: memref<8x32xf32, #tpu.memory_space<vmem>>) attributes {dimension_semantics = [#tpu.dimension_semantics<parallel>], iteration_bounds = array<i64: 1>, scalar_prefetch = 0 : i64, scratch_operands = 0 : i64, tpu.core_type = #tpu.core_type<tc>, window_params = [{transform_indices = @transform_0, window_bounds = array<i64: 8, 1024>}, {pipeline_mode = #tpu.pipeline_mode<synchronous>, transform_indices = @transform_1, window_bounds = array<i64: 4, 16, 1>}, {pipeline_mode = #tpu.pipeline_mode<synchronous>, transform_indices = @transform_2, window_bounds = array<i64: 16, 1>}, {pipeline_mode = #tpu.pipeline_mode<synchronous>, transform_indices = @transform_3, window_bounds = array<i64: 256, 48>}, {pipeline_mode = #tpu.pipeline_mode<synchronous>, transform_indices = @transform_4, window_bounds = array<i64: 16, 48>}, {pipeline_mode = #tpu.pipeline_mode<synchronous>, transform_indices = @transform_5, window_bounds = array<i64: 32, 32>}, {pipeline_mode = #tpu.pipeline_mode<synchronous>, transform_indices = @transform_6, window_bounds = array<i64: 1, 32>}, {transform_indices = @transform_7, window_bounds = array<i64: 8, 32>}]} {
    %c0 = arith.constant 0 : index
    %c0_0 = arith.constant 0 : index
    %0 = vector.load %arg1[%c0, %c0_0] : memref<8x1024xf32, #tpu.memory_space<vmem>>, vector<8x256xf32>
    %1 = vector.shape_cast %0 : vector<8x256xf32> to vector<8x1x256xf32>
    %c0_1 = arith.constant 0 : index
    %c0_2 = arith.constant 0 : index
    %c0_3 = arith.constant 0 : index
    %2 = vector.load %arg2[%c0_1, %c0_2, %c0_3] : memref<4x16x1xf32, #tpu.memory_space<vmem>>, vector<1x16x1xf32>
    %3 = vector.shape_cast %2 : vector<1x16x1xf32> to vector<16x1xf32>
    %4 = vector.shape_cast %3 : vector<16x1xf32> to vector<1x16x1xf32>
    %5 = vector.broadcast %1 : vector<8x1x256xf32> to vector<8x16x256xf32>
    %6 = vector.broadcast %4 : vector<1x16x1xf32> to vector<8x16x256xf32>
    %7 = arith.mulf %5, %6 : vector<8x16x256xf32>
    %c0_4 = arith.constant 0 : index
    %c256 = arith.constant 256 : index
    %8 = vector.load %arg1[%c0_4, %c256] : memref<8x1024xf32, #tpu.memory_space<vmem>>, vector<8x256xf32>
    %9 = vector.shape_cast %8 : vector<8x256xf32> to vector<8x1x256xf32>
    %c1 = arith.constant 1 : index
    %c0_5 = arith.constant 0 : index
    %c0_6 = arith.constant 0 : index
    %10 = vector.load %arg2[%c1, %c0_5, %c0_6] : memref<4x16x1xf32, #tpu.memory_space<vmem>>, vector<1x16x1xf32>
    %11 = vector.shape_cast %10 : vector<1x16x1xf32> to vector<16x1xf32>
    %12 = vector.shape_cast %11 : vector<16x1xf32> to vector<1x16x1xf32>
    %13 = vector.broadcast %9 : vector<8x1x256xf32> to vector<8x16x256xf32>
    %14 = vector.broadcast %12 : vector<1x16x1xf32> to vector<8x16x256xf32>
    %15 = arith.mulf %13, %14 : vector<8x16x256xf32>
    %16 = arith.addf %7, %15 : vector<8x16x256xf32>
    %c0_7 = arith.constant 0 : index
    %c512 = arith.constant 512 : index
    %17 = vector.load %arg1[%c0_7, %c512] : memref<8x1024xf32, #tpu.memory_space<vmem>>, vector<8x256xf32>
    %18 = vector.shape_cast %17 : vector<8x256xf32> to vector<8x1x256xf32>
    %c2 = arith.constant 2 : index
    %c0_8 = arith.constant 0 : index
    %c0_9 = arith.constant 0 : index
    %19 = vector.load %arg2[%c2, %c0_8, %c0_9] : memref<4x16x1xf32, #tpu.memory_space<vmem>>, vector<1x16x1xf32>
    %20 = vector.shape_cast %19 : vector<1x16x1xf32> to vector<16x1xf32>
    %21 = vector.shape_cast %20 : vector<16x1xf32> to vector<1x16x1xf32>
    %22 = vector.broadcast %18 : vector<8x1x256xf32> to vector<8x16x256xf32>
    %23 = vector.broadcast %21 : vector<1x16x1xf32> to vector<8x16x256xf32>
    %24 = arith.mulf %22, %23 : vector<8x16x256xf32>
    %25 = arith.addf %16, %24 : vector<8x16x256xf32>
    %c0_10 = arith.constant 0 : index
    %c768 = arith.constant 768 : index
    %26 = vector.load %arg1[%c0_10, %c768] : memref<8x1024xf32, #tpu.memory_space<vmem>>, vector<8x256xf32>
    %27 = vector.shape_cast %26 : vector<8x256xf32> to vector<8x1x256xf32>
    %c3 = arith.constant 3 : index
    %c0_11 = arith.constant 0 : index
    %c0_12 = arith.constant 0 : index
    %28 = vector.load %arg2[%c3, %c0_11, %c0_12] : memref<4x16x1xf32, #tpu.memory_space<vmem>>, vector<1x16x1xf32>
    %29 = vector.shape_cast %28 : vector<1x16x1xf32> to vector<16x1xf32>
    %30 = vector.shape_cast %29 : vector<16x1xf32> to vector<1x16x1xf32>
    %31 = vector.broadcast %27 : vector<8x1x256xf32> to vector<8x16x256xf32>
    %32 = vector.broadcast %30 : vector<1x16x1xf32> to vector<8x16x256xf32>
    %33 = arith.mulf %31, %32 : vector<8x16x256xf32>
    %34 = arith.addf %25, %33 : vector<8x16x256xf32>
    %c0_13 = arith.constant 0 : index
    %c0_14 = arith.constant 0 : index
    %35 = vector.load %arg3[%c0_13, %c0_14] : memref<16x1xf32, #tpu.memory_space<vmem>>, vector<16x1xf32>
    %36 = vector.shape_cast %35 : vector<16x1xf32> to vector<1x16x1xf32>
    %37 = vector.broadcast %36 : vector<1x16x1xf32> to vector<8x16x256xf32>
    %38 = arith.addf %34, %37 : vector<8x16x256xf32>
    %39 = vector.shape_cast %38 : vector<8x16x256xf32> to vector<128x256xf32>
    %cst = arith.constant dense<0xFF800000> : vector<128xf32>
    %40 = vector.multi_reduction <maximumf>, %39, %cst [1] : vector<128x256xf32> to vector<128xf32>
    %41 = vector.shape_cast %40 : vector<128xf32> to vector<128x1xf32>
    %42 = vector.broadcast %41 : vector<128x1xf32> to vector<128x256xf32>
    %43 = arith.subf %39, %42 : vector<128x256xf32>
    %44 = math.exp %43 : vector<128x256xf32>
    %c0_15 = arith.constant 0 : index
    %c0_16 = arith.constant 0 : index
    %45 = vector.load %arg4[%c0_15, %c0_16] : memref<256x48xf32, #tpu.memory_space<vmem>>, vector<256x48xf32>
    %cst_17 = arith.constant dense<0.000000e+00> : vector<128x48xf32>
    %46 = tpu.matmul %44, %45, %cst_17 {dimension_numbers = #tpu.dot_dimension_numbers<[1], [0], [0], [1], [0, 0, 1, 1], [], []>} : vector<128x256xf32>, vector<256x48xf32>, vector<128x48xf32> -> vector<128x48xf32>
    %47 = vector.shape_cast %46 : vector<128x48xf32> to vector<8x16x48xf32>
    %c0_18 = arith.constant 0 : index
    %c0_19 = arith.constant 0 : index
    %48 = vector.load %arg5[%c0_18, %c0_19] : memref<16x48xf32, #tpu.memory_space<vmem>>, vector<16x48xf32>
    %49 = vector.shape_cast %48 : vector<16x48xf32> to vector<1x16x48xf32>
    %50 = vector.broadcast %49 : vector<1x16x48xf32> to vector<8x16x48xf32>
    %51 = arith.mulf %47, %50 : vector<8x16x48xf32>
    %cst_20 = arith.constant dense<0.000000e+00> : vector<8x48xf32>
    %52 = vector.multi_reduction <add>, %51, %cst_20 [1] : vector<8x16x48xf32> to vector<8x48xf32>
    %53 = vector.extract_strided_slice %52 {offsets = [0, 0], sizes = [8, 16], strides = [1, 1]} : vector<8x48xf32> to vector<8x16xf32>
    %54 = vector.extract_strided_slice %52 {offsets = [0, 16], sizes = [8, 16], strides = [1, 1]} : vector<8x48xf32> to vector<8x16xf32>
    %55 = vector.extract_strided_slice %52 {offsets = [0, 32], sizes = [8, 16], strides = [1, 1]} : vector<8x48xf32> to vector<8x16xf32>
    %cst_21 = arith.constant 1.000000e+00 : f32
    %56 = vector.broadcast %cst_21 : f32 to vector<8x16xf32>
    %57 = arith.divf %56, %53 : vector<8x16xf32>
    %58 = arith.mulf %54, %57 : vector<8x16xf32>
    %59 = arith.mulf %55, %57 : vector<8x16xf32>
    %60 = tpu.concatenate %58, %59 in 1 : vector<8x16xf32>, vector<8x16xf32> -> vector<8x32xf32>
    %c0_22 = arith.constant 0 : index
    %c0_23 = arith.constant 0 : index
    %61 = vector.load %arg6[%c0_22, %c0_23] : memref<32x32xf32, #tpu.memory_space<vmem>>, vector<32x32xf32>
    %cst_24 = arith.constant dense<0.000000e+00> : vector<8x32xf32>
    %62 = tpu.matmul %60, %61, %cst_24 {dimension_numbers = #tpu.dot_dimension_numbers<[1], [0], [0], [1], [0, 0, 1, 1], [], []>} : vector<8x32xf32>, vector<32x32xf32>, vector<8x32xf32> -> vector<8x32xf32>
    %c0_25 = arith.constant 0 : index
    %c0_26 = arith.constant 0 : index
    %63 = vector.load %arg7[%c0_25, %c0_26] : memref<1x32xf32, #tpu.memory_space<vmem>>, vector<1x32xf32>
    %64 = vector.broadcast %63 : vector<1x32xf32> to vector<8x32xf32>
    %65 = arith.addf %62, %64 : vector<8x32xf32>
    %c0_27 = arith.constant 0 : index
    %c0_28 = arith.constant 0 : index
    %66 = vector.load %arg8[%c0_27, %c0_28] : memref<8x32xf32, #tpu.memory_space<vmem>>, vector<8x32xf32>
    tpu.vector_store %arg8[%c0_27, %c0_28], %65 {strides = array<i32>} : memref<8x32xf32, #tpu.memory_space<vmem>>, vector<8x32xf32>,
    return
  }
  func.func @transform_0(%arg0: i32) -> (i32, i32) {
    %c0_i32 = arith.constant 0 : i32
    %c0_i32_0 = arith.constant 0 : i32
    return %arg0, %c0_i32 : i32, i32
  }
  func.func @transform_1(%arg0: i32) -> (i32, i32, i32) {
    %c0_i32 = arith.constant 0 : i32
    %c0_i32_0 = arith.constant 0 : i32
    %c0_i32_1 = arith.constant 0 : i32
    %c0_i32_2 = arith.constant 0 : i32
    return %c0_i32, %c0_i32_0, %c0_i32_1 : i32, i32, i32
  }
  func.func @transform_2(%arg0: i32) -> (i32, i32) {
    %c0_i32 = arith.constant 0 : i32
    %c0_i32_0 = arith.constant 0 : i32
    %c0_i32_1 = arith.constant 0 : i32
    return %c0_i32, %c0_i32_0 : i32, i32
  }
  func.func @transform_3(%arg0: i32) -> (i32, i32) {
    %c0_i32 = arith.constant 0 : i32
    %c0_i32_0 = arith.constant 0 : i32
    %c0_i32_1 = arith.constant 0 : i32
    return %c0_i32, %c0_i32_0 : i32, i32
  }
  func.func @transform_4(%arg0: i32) -> (i32, i32) {
    %c0_i32 = arith.constant 0 : i32
    %c0_i32_0 = arith.constant 0 : i32
    %c0_i32_1 = arith.constant 0 : i32
    return %c0_i32, %c0_i32_0 : i32, i32
  }
  func.func @transform_5(%arg0: i32) -> (i32, i32) {
    %c0_i32 = arith.constant 0 : i32
    %c0_i32_0 = arith.constant 0 : i32
    %c0_i32_1 = arith.constant 0 : i32
    return %c0_i32, %c0_i32_0 : i32, i32
  }
  func.func @transform_6(%arg0: i32) -> (i32, i32) {
    %c0_i32 = arith.constant 0 : i32
    %c0_i32_0 = arith.constant 0 : i32
    %c0_i32_1 = arith.constant 0 : i32
    return %c0_i32, %c0_i32_0 : i32, i32
  }
  func.func @transform_7(%arg0: i32) -> (i32, i32) {
    %c0_i32 = arith.constant 0 : i32
    %c0_i32_0 = arith.constant 0 : i32
    return %arg0, %c0_i32 : i32, i32
  }
}

</mosaic_0001>

<llo_original>
// kernel: tpu_custom_call.1
$region0: #{tpu_custom_call.1}
  #allocation0 [shape = 'u32[]', space=smem, size = 0x4, offset = 0x4, fixed_abs, tag = 'smem constant byte address 0x4 - core index']
  #allocation1 [shape = 'u32[144,128]{1,0:T(1,128)}', space=vmem, size = 0x12000, scoped, tag = 'internal scratch']
  %s0 = inlined_call_operand.vmem [shape: f32[8,1024], index: 0, kind: input, shape index: {}]
  %s1 = inlined_call_operand.vmem [shape: f32[4,16,1], index: 1, kind: input, shape index: {}]
  %s2 = inlined_call_operand.vmem [shape: f32[16,1], index: 2, kind: input, shape index: {}]
  %s3 = inlined_call_operand.vmem [shape: f32[256,48], index: 3, kind: input, shape index: {}]
  %s4 = inlined_call_operand.vmem [shape: f32[16,48], index: 4, kind: input, shape index: {}]
  %s5 = inlined_call_operand.vmem [shape: f32[32,32], index: 5, kind: input, shape index: {}]
  %s6 = inlined_call_operand.vmem [shape: f32[1,32], index: 6, kind: input, shape index: {}]
  %s7 = inlined_call_operand.hbm [shape: f32[8,32], index: 7, kind: output, shape index: {}]
  %s8 = sld [smem:[#allocation0]]
  $region38: #{tpu_custom_call.1} parent=0
    _
  %s10 = ssub.s32 1, %s8
  %s11 = scalar_select 0, %s10, %s8
  $region1: #{tpu_custom_call.1} parent=0
    #allocation2 [shape = 'u8[4096]{0}', space=vmem, size = 0x1000, scoped, tag = 'output window, operand 0, single buffered']
    #allocation3 [shape = 's32[1]{0}', space=sflag, size = 0x4, scoped, tag = 'scoped memory for tpu_custom_call.1']
    %12 = vsyncpa [#allocation3], 0
    // Predicated region
    $region2: #{tpu_custom_call.1} parent=1 // pred_check
      _
    $region3: #{tpu_custom_call.1} parent=1 // pred_check_branch
      %14 = sbr.rel (0) target = $region5
    $region4: #{tpu_custom_call.1} parent=1 // pred_region
      _
    $region5: #{tpu_custom_call.1} parent=1 // pred_fallthru
      _
    // Predicated region
    $region6: #{tpu_custom_call.1} parent=1 // pred_check
      _
    $region7: #{tpu_custom_call.1} parent=1 // pred_check_branch
      %16 = sbr.rel (0) target = $region9
    $region8: #{tpu_custom_call.1} parent=1 // pred_region
      _
    $region9: #{tpu_custom_call.1} parent=1 // pred_fallthru
      _
    // Predicated region
    $region10: #{tpu_custom_call.1} parent=1 // pred_check
      _
    $region11: #{tpu_custom_call.1} parent=1 // pred_check_branch
      %18 = sbr.rel (0) target = $region13
    $region12: #{tpu_custom_call.1} parent=1 // pred_region
      _
    $region13: #{tpu_custom_call.1} parent=1 // pred_fallthru
      _
    // Predicated region
    $region14: #{tpu_custom_call.1} parent=1 // pred_check
      _
    $region15: #{tpu_custom_call.1} parent=1 // pred_check_branch
      %20 = sbr.rel (0) target = $region17
    $region16: #{tpu_custom_call.1} parent=1 // pred_region
      _
    $region17: #{tpu_custom_call.1} parent=1 // pred_fallthru
      _
    // Predicated region
    $region18: #{tpu_custom_call.1} parent=1 // pred_check
      _
    $region19: #{tpu_custom_call.1} parent=1 // pred_check_branch
      %22 = sbr.rel (0) target = $region21
    $region20: #{tpu_custom_call.1} parent=1 // pred_region
      _
    $region21: #{tpu_custom_call.1} parent=1 // pred_fallthru
      _
    // Predicated region
    $region22: #{tpu_custom_call.1} parent=1 // pred_check
      _
    $region23: #{tpu_custom_call.1} parent=1 // pred_check_branch
      %24 = sbr.rel (0) target = $region25
    $region24: #{tpu_custom_call.1} parent=1 // pred_region
      _
    $region25: #{tpu_custom_call.1} parent=1 // pred_fallthru
      _
    // Predicated region
    $region26: #{tpu_custom_call.1} parent=1 // pred_check
      _
    $region27: #{tpu_custom_call.1} parent=1 // pred_check_branch
      %26 = sbr.rel (0) target = $region29
    $region28: #{tpu_custom_call.1} parent=1 // pred_region
      _
    $region29: #{tpu_custom_call.1} parent=1 // pred_fallthru
      _
    %v27 = vld [vmem:[%s0] sm:$0xff]
    %v28 = vld [vmem:[%s0 + $0x8] sm:$0xff]
    %v31 = vcombine.low %v27, %v28
    %v32 = vcombine.high %v27, %v28
    %v34 = vunpack.c.l.s4 1966171168
    %v35 = vunpack.c.0.s8 %v34
    %v36 = vlaneseq
    %v37 = vshrl.u32 %v36, 7
    %v38 = vsub.s32 %v35, %v37
    %v39 = vrot.slane %v31, %v38
    %v41 = vunpack.c.l.s4 1966171168
    %v42 = vunpack.c.0.s8 %v41
    %v43 = vlaneseq
    %v44 = vshrl.u32 %v43, 7
    %v45 = vsub.s32 %v42, %v44
    %v46 = vrot.slane %v32, %v45
    %v47 = vcombine.high %v39, %v39
    %v48 = vcombine.high %v46, %v46
    %v50 = vunpack.c.l.s4 1966171168
    %v51 = vunpack.c.0.s8 %v50
    %v52 = vlaneseq
    %v53 = vshrl.u32 %v52, 7
    %v54 = vsub.s32 %v51, %v53
    %v55 = vrot.slane %v39, %v54
    %v57 = vunpack.c.l.s4 1966171168
    %v58 = vunpack.c.0.s8 %v57
    %v59 = vlaneseq
    %v60 = vshrl.u32 %v59, 7
    %v61 = vsub.s32 %v58, %v60
    %v62 = vrot.slane %v46, %v61
    %v64 = vunpack.c.l.s4 1966171168
    %v65 = vunpack.c.0.s8 %v64
    %v66 = vlaneseq
    %v67 = vshrl.u32 %v66, 7
    %v68 = vsub.s32 %v65, %v67
    %v69 = vrot.slane %v47, %v68
    %v71 = vunpack.c.l.s4 1966171168
    %v72 = vunpack.c.0.s8 %v71
    %v73 = vlaneseq
    %v74 = vshrl.u32 %v73, 7
    %v75 = vsub.s32 %v72, %v74
    %v76 = vrot.slane %v48, %v75
    %v77 = vcombine.high %v55, %v55
    %v78 = vcombine.high %v62, %v62
    %v79 = vcombine.high %v69, %v69
    %v80 = vcombine.high %v76, %v76
    %v81 = vld [vmem:[%s1] sm:$0xff]
    %v82 = vld [vmem:[%s1 + $0x8] sm:$0xff]
    %v83 = vlaneseq
    %v84 = vshrl.u32 %v83, 7
    %v85 = vsub.s32 0, %v84
    %v86 = vrot.slane %v55, %v85
    %v87 = vlaneseq
    %v88 = vshrl.u32 %v87, 7
    %v89 = vsub.s32 1, %v88
    %v90 = vrot.slane %v55, %v89
    %v91 = vlaneseq
    %v92 = vshrl.u32 %v91, 7
    %v93 = vsub.s32 0, %v92
    %v94 = vrot.slane %v69, %v93
    %v95 = vlaneseq
    %v96 = vshrl.u32 %v95, 7
    %v97 = vsub.s32 1, %v96
    %v98 = vrot.slane %v69, %v97
    %v99 = vlaneseq
    %v100 = vshrl.u32 %v99, 7
    %v101 = vsub.s32 0, %v100
    %v102 = vrot.slane %v77, %v101
    %v103 = vlaneseq
    %v104 = vshrl.u32 %v103, 7
    %v105 = vsub.s32 1, %v104
    %v106 = vrot.slane %v77, %v105
    %v107 = vlaneseq
    %v108 = vshrl.u32 %v107, 7
    %v109 = vsub.s32 0, %v108
    %v110 = vrot.slane %v79, %v109
    %v111 = vlaneseq
    %v112 = vshrl.u32 %v111, 7
    %v113 = vsub.s32 1, %v112
    %v114 = vrot.slane %v79, %v113
    %v115 = vlaneseq
    %v116 = vshrl.u32 %v115, 7
    %v117 = vsub.s32 0, %v116
    %v118 = vrot.slane %v62, %v117
    %v119 = vlaneseq
    %v120 = vshrl.u32 %v119, 7
    %v121 = vsub.s32 1, %v120
    %v122 = vrot.slane %v62, %v121
    %v123 = vlaneseq
    %v124 = vshrl.u32 %v123, 7
    %v125 = vsub.s32 0, %v124
    %v126 = vrot.slane %v76, %v125
    %v127 = vlaneseq
    %v128 = vshrl.u32 %v127, 7
    %v129 = vsub.s32 1, %v128
    %v130 = vrot.slane %v76, %v129
    %v131 = vlaneseq
    %v132 = vshrl.u32 %v131, 7
    %v133 = vsub.s32 0, %v132
    %v134 = vrot.slane %v78, %v133
    %v135 = vlaneseq
    %v136 = vshrl.u32 %v135, 7
    %v137 = vsub.s32 1, %v136
    %v138 = vrot.slane %v78, %v137
    %v139 = vlaneseq
    %v140 = vshrl.u32 %v139, 7
    %v141 = vsub.s32 0, %v140
    %v142 = vrot.slane %v80, %v141
    %v143 = vlaneseq
    %v144 = vshrl.u32 %v143, 7
    %v145 = vsub.s32 1, %v144
    %v146 = vrot.slane %v80, %v145
    %164 = vset.pattern.permute.xlu0 0
    %165 = vperm.xlu0 %164, %v81
    %v166 = vpop.permute.xlu0 %165
    %169 = vset.pattern.permute.xlu0 0
    %170 = vperm.xlu0 %169, %v82
    %v171 = vpop.permute.xlu0 %170
    %v173 = vmul.f32 %v86, %v166
    %v174 = vmul.f32 %v90, %v166
    %v175 = vmul.f32 %v86, %v171
    %v176 = vmul.f32 %v90, %v171
    %v177 = vmul.f32 %v94, %v166
    %v178 = vmul.f32 %v98, %v166
    %v179 = vmul.f32 %v94, %v171
    %v180 = vmul.f32 %v98, %v171
    %v181 = vmul.f32 %v102, %v166
    %v182 = vmul.f32 %v106, %v166
    %v183 = vmul.f32 %v102, %v171
    %v184 = vmul.f32 %v106, %v171
    %v185 = vmul.f32 %v110, %v166
    %v186 = vmul.f32 %v114, %v166
    %v187 = vmul.f32 %v110, %v171
    %v188 = vmul.f32 %v114, %v171
    %v189 = vmul.f32 %v118, %v166
    %v190 = vmul.f32 %v122, %v166
    %v191 = vmul.f32 %v118, %v171
    %v192 = vmul.f32 %v122, %v171
    %v193 = vmul.f32 %v126, %v166
    %v194 = vmul.f32 %v130, %v166
    %v195 = vmul.f32 %v126, %v171
    %v196 = vmul.f32 %v130, %v171
    %v197 = vmul.f32 %v134, %v166
    %v198 = vmul.f32 %v138, %v166
    %v199 = vmul.f32 %v134, %v171
    %v200 = vmul.f32 %v138, %v171
    %v201 = vmul.f32 %v142, %v166
    %v202 = vmul.f32 %v146, %v166
    %v203 = vmul.f32 %v142, %v171
    %v204 = vmul.f32 %v146, %v171
    %v205 = vld [vmem:[%s0 + $0x10] sm:$0xff]
    %v206 = vld [vmem:[%s0 + $0x18] sm:$0xff]
    %v209 = vcombine.low %v205, %v206
    %v210 = vcombine.high %v205, %v206
    %v212 = vunpack.c.l.s4 1966171168
    %v213 = vunpack.c.0.s8 %v212
    %v214 = vlaneseq
    %v215 = vshrl.u32 %v214, 7
    %v216 = vsub.s32 %v213, %v215
    %v217 = vrot.slane %v209, %v216
    %v219 = vunpack.c.l.s4 1966171168
    %v220 = vunpack.c.0.s8 %v219
    %v221 = vlaneseq
    %v222 = vshrl.u32 %v221, 7
    %v223 = vsub.s32 %v220, %v222
    %v224 = vrot.slane %v210, %v223
    %v225 = vcombine.high %v217, %v217
    %v226 = vcombine.high %v224, %v224
    %v228 = vunpack.c.l.s4 1966171168
    %v229 = vunpack.c.0.s8 %v228
    %v230 = vlaneseq
    %v231 = vshrl.u32 %v230, 7
    %v232 = vsub.s32 %v229, %v231
    %v233 = vrot.slane %v217, %v232
    %v235 = vunpack.c.l.s4 1966171168
    %v236 = vunpack.c.0.s8 %v235
    %v237 = vlaneseq
    %v238 = vshrl.u32 %v237, 7
    %v239 = vsub.s32 %v236, %v238
    %v240 = vrot.slane %v224, %v239
    %v242 = vunpack.c.l.s4 1966171168
    %v243 = vunpack.c.0.s8 %v242
    %v244 = vlaneseq
    %v245 = vshrl.u32 %v244, 7
    %v246 = vsub.s32 %v243, %v245
    %v247 = vrot.slane %v225, %v246
    %v249 = vunpack.c.l.s4 1966171168
    %v250 = vunpack.c.0.s8 %v249
    %v251 = vlaneseq
    %v252 = vshrl.u32 %v251, 7
    %v253 = vsub.s32 %v250, %v252
    %v254 = vrot.slane %v226, %v253
    %v255 = vcombine.high %v233, %v233
    %v256 = vcombine.high %v240, %v240
    %v257 = vcombine.high %v247, %v247
    %v258 = vcombine.high %v254, %v254
    %s259 = scalar_lea.vmem %s1, 16
    %v260 = vld [vmem:[%s259] sm:$0xff]
    %v261 = vld [vmem:[%s259 + $0x8] sm:$0xff]
    %v262 = vlaneseq
    %v263 = vshrl.u32 %v262, 7
    %v264 = vsub.s32 0, %v263
    %v265 = vrot.slane %v233, %v264
    %v266 = vlaneseq
    %v267 = vshrl.u32 %v266, 7
    %v268 = vsub.s32 1, %v267
    %v269 = vrot.slane %v233, %v268
    %v270 = vlaneseq
    %v271 = vshrl.u32 %v270, 7
    %v272 = vsub.s32 0, %v271
    %v273 = vrot.slane %v247, %v272
    %v274 = vlaneseq
    %v275 = vshrl.u32 %v274, 7
    %v276 = vsub.s32 1, %v275
    %v277 = vrot.slane %v247, %v276
    %v278 = vlaneseq
    %v279 = vshrl.u32 %v278, 7
    %v280 = vsub.s32 0, %v279
    %v281 = vrot.slane %v255, %v280
    %v282 = vlaneseq
    %v283 = vshrl.u32 %v282, 7
    %v284 = vsub.s32 1, %v283
    %v285 = vrot.slane %v255, %v284
    %v286 = vlaneseq
    %v287 = vshrl.u32 %v286, 7
    %v288 = vsub.s32 0, %v287
    %v289 = vrot.slane %v257, %v288
    %v290 = vlaneseq
    %v291 = vshrl.u32 %v290, 7
    %v292 = vsub.s32 1, %v291
    %v293 = vrot.slane %v257, %v292
    %v294 = vlaneseq
    %v295 = vshrl.u32 %v294, 7
    %v296 = vsub.s32 0, %v295
    %v297 = vrot.slane %v240, %v296
    %v298 = vlaneseq
    %v299 = vshrl.u32 %v298, 7
    %v300 = vsub.s32 1, %v299
    %v301 = vrot.slane %v240, %v300
    %v302 = vlaneseq
    %v303 = vshrl.u32 %v302, 7
    %v304 = vsub.s32 0, %v303
    %v305 = vrot.slane %v254, %v304
    %v306 = vlaneseq
    %v307 = vshrl.u32 %v306, 7
    %v308 = vsub.s32 1, %v307
    %v309 = vrot.slane %v254, %v308
    %v310 = vlaneseq
    %v311 = vshrl.u32 %v310, 7
    %v312 = vsub.s32 0, %v311
    %v313 = vrot.slane %v256, %v312
    %v314 = vlaneseq
    %v315 = vshrl.u32 %v314, 7
    %v316 = vsub.s32 1, %v315
    %v317 = vrot.slane %v256, %v316
    %v318 = vlaneseq
    %v319 = vshrl.u32 %v318, 7
    %v320 = vsub.s32 0, %v319
    %v321 = vrot.slane %v258, %v320
    %v322 = vlaneseq
    %v323 = vshrl.u32 %v322, 7
    %v324 = vsub.s32 1, %v323
    %v325 = vrot.slane %v258, %v324
    %343 = vset.pattern.permute.xlu0 0
    %344 = vperm.xlu0 %343, %v260
    %v345 = vpop.permute.xlu0 %344
    %348 = vset.pattern.permute.xlu0 0
    %349 = vperm.xlu0 %348, %v261
    %v350 = vpop.permute.xlu0 %349
    %v352 = vmul.f32 %v265, %v345
    %v353 = vmul.f32 %v269, %v345
    %v354 = vmul.f32 %v265, %v350
    %v355 = vmul.f32 %v269, %v350
    %v356 = vmul.f32 %v273, %v345
    %v357 = vmul.f32 %v277, %v345
    %v358 = vmul.f32 %v273, %v350
    %v359 = vmul.f32 %v277, %v350
    %v360 = vmul.f32 %v281, %v345
    %v361 = vmul.f32 %v285, %v345
    %v362 = vmul.f32 %v281, %v350
    %v363 = vmul.f32 %v285, %v350
    %v364 = vmul.f32 %v289, %v345
    %v365 = vmul.f32 %v293, %v345
    %v366 = vmul.f32 %v289, %v350
    %v367 = vmul.f32 %v293, %v350
    %v368 = vmul.f32 %v297, %v345
    %v369 = vmul.f32 %v301, %v345
    %v370 = vmul.f32 %v297, %v350
    %v371 = vmul.f32 %v301, %v350
    %v372 = vmul.f32 %v305, %v345
    %v373 = vmul.f32 %v309, %v345
    %v374 = vmul.f32 %v305, %v350
    %v375 = vmul.f32 %v309, %v350
    %v376 = vmul.f32 %v313, %v345
    %v377 = vmul.f32 %v317, %v345
    %v378 = vmul.f32 %v313, %v350
    %v379 = vmul.f32 %v317, %v350
    %v380 = vmul.f32 %v321, %v345
    %v381 = vmul.f32 %v325, %v345
    %v382 = vmul.f32 %v321, %v350
    %v383 = vmul.f32 %v325, %v350
    %v384 = vadd.f32 %v173, %v352
    %v385 = vadd.f32 %v174, %v353
    %v386 = vadd.f32 %v175, %v354
    %v387 = vadd.f32 %v176, %v355
    %v388 = vadd.f32 %v177, %v356
    %v389 = vadd.f32 %v178, %v357
    %v390 = vadd.f32 %v179, %v358
    %v391 = vadd.f32 %v180, %v359
    %v392 = vadd.f32 %v181, %v360
    %v393 = vadd.f32 %v182, %v361
    %v394 = vadd.f32 %v183, %v362
    %v395 = vadd.f32 %v184, %v363
    %v396 = vadd.f32 %v185, %v364
    %v397 = vadd.f32 %v186, %v365
    %v398 = vadd.f32 %v187, %v366
    %v399 = vadd.f32 %v188, %v367
    %v400 = vadd.f32 %v189, %v368
    %v401 = vadd.f32 %v190, %v369
    %v402 = vadd.f32 %v191, %v370
    %v403 = vadd.f32 %v192, %v371
    %v404 = vadd.f32 %v193, %v372
    %v405 = vadd.f32 %v194, %v373
    %v406 = vadd.f32 %v195, %v374
    %v407 = vadd.f32 %v196, %v375
    %v408 = vadd.f32 %v197, %v376
    %v409 = vadd.f32 %v198, %v377
    %v410 = vadd.f32 %v199, %v378
    %v411 = vadd.f32 %v200, %v379
    %v412 = vadd.f32 %v201, %v380
    %v413 = vadd.f32 %v202, %v381
    %v414 = vadd.f32 %v203, %v382
    %v415 = vadd.f32 %v204, %v383
    %v416 = vld [vmem:[%s0 + $0x20] sm:$0xff]
    %v417 = vld [vmem:[%s0 + $0x28] sm:$0xff]
    %v420 = vcombine.low %v416, %v417
    %v421 = vcombine.high %v416, %v417
    %v423 = vunpack.c.l.s4 1966171168
    %v424 = vunpack.c.0.s8 %v423
    %v425 = vlaneseq
    %v426 = vshrl.u32 %v425, 7
    %v427 = vsub.s32 %v424, %v426
    %v428 = vrot.slane %v420, %v427
    %v430 = vunpack.c.l.s4 1966171168
    %v431 = vunpack.c.0.s8 %v430
    %v432 = vlaneseq
    %v433 = vshrl.u32 %v432, 7
    %v434 = vsub.s32 %v431, %v433
    %v435 = vrot.slane %v421, %v434
    %v436 = vcombine.high %v428, %v428
    %v437 = vcombine.high %v435, %v435
    %v439 = vunpack.c.l.s4 1966171168
    %v440 = vunpack.c.0.s8 %v439
    %v441 = vlaneseq
    %v442 = vshrl.u32 %v441, 7
    %v443 = vsub.s32 %v440, %v442
    %v444 = vrot.slane %v428, %v443
    %v446 = vunpack.c.l.s4 1966171168
    %v447 = vunpack.c.0.s8 %v446
    %v448 = vlaneseq
    %v449 = vshrl.u32 %v448, 7
    %v450 = vsub.s32 %v447, %v449
    %v451 = vrot.slane %v435, %v450
    %v453 = vunpack.c.l.s4 1966171168
    %v454 = vunpack.c.0.s8 %v453
    %v455 = vlaneseq
    %v456 = vshrl.u32 %v455, 7
    %v457 = vsub.s32 %v454, %v456
    %v458 = vrot.slane %v436, %v457
    %v460 = vunpack.c.l.s4 1966171168
    %v461 = vunpack.c.0.s8 %v460
    %v462 = vlaneseq
    %v463 = vshrl.u32 %v462, 7
    %v464 = vsub.s32 %v461, %v463
    %v465 = vrot.slane %v437, %v464
    %v466 = vcombine.high %v444, %v444
    %v467 = vcombine.high %v451, %v451
    %v468 = vcombine.high %v458, %v458
    %v469 = vcombine.high %v465, %v465
    %s470 = scalar_lea.vmem %s1, 32
    %v471 = vld [vmem:[%s470] sm:$0xff]
    %v472 = vld [vmem:[%s470 + $0x8] sm:$0xff]
    %v473 = vlaneseq
    %v474 = vshrl.u32 %v473, 7
    %v475 = vsub.s32 0, %v474
    %v476 = vrot.slane %v444, %v475
    %v477 = vlaneseq
    %v478 = vshrl.u32 %v477, 7
    %v479 = vsub.s32 1, %v478
    %v480 = vrot.slane %v444, %v479
    %v481 = vlaneseq
    %v482 = vshrl.u32 %v481, 7
    %v483 = vsub.s32 0, %v482
    %v484 = vrot.slane %v458, %v483
    %v485 = vlaneseq
    %v486 = vshrl.u32 %v485, 7
    %v487 = vsub.s32 1, %v486
    %v488 = vrot.slane %v458, %v487
    %v489 = vlaneseq
    %v490 = vshrl.u32 %v489, 7
    %v491 = vsub.s32 0, %v490
    %v492 = vrot.slane %v466, %v491
    %v493 = vlaneseq
    %v494 = vshrl.u32 %v493, 7
    %v495 = vsub.s32 1, %v494
    %v496 = vrot.slane %v466, %v495
    %v497 = vlaneseq
    %v498 = vshrl.u32 %v497, 7
    %v499 = vsub.s32 0, %v498
    %v500 = vrot.slane %v468, %v499
    %v501 = vlaneseq
    %v502 = vshrl.u32 %v501, 7
    %v503 = vsub.s32 1, %v502
    %v504 = vrot.slane %v468, %v503
    %v505 = vlaneseq
    %v506 = vshrl.u32 %v505, 7
    %v507 = vsub.s32 0, %v506
    %v508 = vrot.slane %v451, %v507
    %v509 = vlaneseq
    %v510 = vshrl.u32 %v509, 7
    %v511 = vsub.s32 1, %v510
    %v512 = vrot.slane %v451, %v511
    %v513 = vlaneseq
    %v514 = vshrl.u32 %v513, 7
    %v515 = vsub.s32 0, %v514
    %v516 = vrot.slane %v465, %v515
    %v517 = vlaneseq
    %v518 = vshrl.u32 %v517, 7
    %v519 = vsub.s32 1, %v518
    %v520 = vrot.slane %v465, %v519
    %v521 = vlaneseq
    %v522 = vshrl.u32 %v521, 7
    %v523 = vsub.s32 0, %v522
    %v524 = vrot.slane %v467, %v523
    %v525 = vlaneseq
    %v526 = vshrl.u32 %v525, 7
    %v527 = vsub.s32 1, %v526
    %v528 = vrot.slane %v467, %v527
    %v529 = vlaneseq
    %v530 = vshrl.u32 %v529, 7
    %v531 = vsub.s32 0, %v530
    %v532 = vrot.slane %v469, %v531
    %v533 = vlaneseq
    %v534 = vshrl.u32 %v533, 7
    %v535 = vsub.s32 1, %v534
    %v536 = vrot.slane %v469, %v535
    %554 = vset.pattern.permute.xlu0 0
    %555 = vperm.xlu0 %554, %v471
    %v556 = vpop.permute.xlu0 %555
    %559 = vset.pattern.permute.xlu0 0
    %560 = vperm.xlu0 %559, %v472
    %v561 = vpop.permute.xlu0 %560
    %v563 = vmul.f32 %v476, %v556
    %v564 = vmul.f32 %v480, %v556
    %v565 = vmul.f32 %v476, %v561
    %v566 = vmul.f32 %v480, %v561
    %v567 = vmul.f32 %v484, %v556
    %v568 = vmul.f32 %v488, %v556
    %v569 = vmul.f32 %v484, %v561
    %v570 = vmul.f32 %v488, %v561
    %v571 = vmul.f32 %v492, %v556
    %v572 = vmul.f32 %v496, %v556
    %v573 = vmul.f32 %v492, %v561
    %v574 = vmul.f32 %v496, %v561
    %v575 = vmul.f32 %v500, %v556
    %v576 = vmul.f32 %v504, %v556
    %v577 = vmul.f32 %v500, %v561
    %v578 = vmul.f32 %v504, %v561
    %v579 = vmul.f32 %v508, %v556
    %v580 = vmul.f32 %v512, %v556
    %v581 = vmul.f32 %v508, %v561
    %v582 = vmul.f32 %v512, %v561
    %v583 = vmul.f32 %v516, %v556
    %v584 = vmul.f32 %v520, %v556
    %v585 = vmul.f32 %v516, %v561
    %v586 = vmul.f32 %v520, %v561
    %v587 = vmul.f32 %v524, %v556
    %v588 = vmul.f32 %v528, %v556
    %v589 = vmul.f32 %v524, %v561
    %v590 = vmul.f32 %v528, %v561
    %v591 = vmul.f32 %v532, %v556
    %v592 = vmul.f32 %v536, %v556
    %v593 = vmul.f32 %v532, %v561
    %v594 = vmul.f32 %v536, %v561
    %v595 = vadd.f32 %v384, %v563
    %v596 = vadd.f32 %v385, %v564
    %v597 = vadd.f32 %v386, %v565
    %v598 = vadd.f32 %v387, %v566
    %v599 = vadd.f32 %v388, %v567
    %v600 = vadd.f32 %v389, %v568
    %v601 = vadd.f32 %v390, %v569
    %v602 = vadd.f32 %v391, %v570
    %v603 = vadd.f32 %v392, %v571
    %v604 = vadd.f32 %v393, %v572
    %v605 = vadd.f32 %v394, %v573
    %v606 = vadd.f32 %v395, %v574
    %v607 = vadd.f32 %v396, %v575
    %v608 = vadd.f32 %v397, %v576
    %v609 = vadd.f32 %v398, %v577
    %v610 = vadd.f32 %v399, %v578
    %v611 = vadd.f32 %v400, %v579
    %v612 = vadd.f32 %v401, %v580
    %v613 = vadd.f32 %v402, %v581
    %v614 = vadd.f32 %v403, %v582
    %v615 = vadd.f32 %v404, %v583
    %v616 = vadd.f32 %v405, %v584
    %v617 = vadd.f32 %v406, %v585
    %v618 = vadd.f32 %v407, %v586
    %v619 = vadd.f32 %v408, %v587
    %v620 = vadd.f32 %v409, %v588
    %v621 = vadd.f32 %v410, %v589
    %v622 = vadd.f32 %v411, %v590
    %v623 = vadd.f32 %v412, %v591
    %v624 = vadd.f32 %v413, %v592
    %v625 = vadd.f32 %v414, %v593
    %v626 = vadd.f32 %v415, %v594
    %v627 = vld [vmem:[%s0 + $0x30] sm:$0xff]
    %v628 = vld [vmem:[%s0 + $0x38] sm:$0xff]
    %v631 = vcombine.low %v627, %v628
    %v632 = vcombine.high %v627, %v628
    %v634 = vunpack.c.l.s4 1966171168
    %v635 = vunpack.c.0.s8 %v634
    %v636 = vlaneseq
    %v637 = vshrl.u32 %v636, 7
    %v638 = vsub.s32 %v635, %v637
    %v639 = vrot.slane %v631, %v638
    %v641 = vunpack.c.l.s4 1966171168
    %v642 = vunpack.c.0.s8 %v641
    %v643 = vlaneseq
    %v644 = vshrl.u32 %v643, 7
    %v645 = vsub.s32 %v642, %v644
    %v646 = vrot.slane %v632, %v645
    %v647 = vcombine.high %v639, %v639
    %v648 = vcombine.high %v646, %v646
    %v650 = vunpack.c.l.s4 1966171168
    %v651 = vunpack.c.0.s8 %v650
    %v652 = vlaneseq
    %v653 = vshrl.u32 %v652, 7
    %v654 = vsub.s32 %v651, %v653
    %v655 = vrot.slane %v639, %v654
    %v657 = vunpack.c.l.s4 1966171168
    %v658 = vunpack.c.0.s8 %v657
    %v659 = vlaneseq
    %v660 = vshrl.u32 %v659, 7
    %v661 = vsub.s32 %v658, %v660
    %v662 = vrot.slane %v646, %v661
    %v664 = vunpack.c.l.s4 1966171168
    %v665 = vunpack.c.0.s8 %v664
    %v666 = vlaneseq
    %v667 = vshrl.u32 %v666, 7
    %v668 = vsub.s32 %v665, %v667
    %v669 = vrot.slane %v647, %v668
    %v671 = vunpack.c.l.s4 1966171168
    %v672 = vunpack.c.0.s8 %v671
    %v673 = vlaneseq
    %v674 = vshrl.u32 %v673, 7
    %v675 = vsub.s32 %v672, %v674
    %v676 = vrot.slane %v648, %v675
    %v677 = vcombine.high %v655, %v655
    %v678 = vcombine.high %v662, %v662
    %v679 = vcombine.high %v669, %v669
    %v680 = vcombine.high %v676, %v676
    %s681 = scalar_lea.vmem %s1, 48
    %v682 = vld [vmem:[%s681] sm:$0xff]
    %v683 = vld [vmem:[%s681 + $0x8] sm:$0xff]
    %v684 = vlaneseq
    %v685 = vshrl.u32 %v684, 7
    %v686 = vsub.s32 0, %v685
    %v687 = vrot.slane %v655, %v686
    %v688 = vlaneseq
    %v689 = vshrl.u32 %v688, 7
    %v690 = vsub.s32 1, %v689
    %v691 = vrot.slane %v655, %v690
    %v692 = vlaneseq
    %v693 = vshrl.u32 %v692, 7
    %v694 = vsub.s32 0, %v693
    %v695 = vrot.slane %v669, %v694
    %v696 = vlaneseq
    %v697 = vshrl.u32 %v696, 7
    %v698 = vsub.s32 1, %v697
    %v699 = vrot.slane %v669, %v698
    %v700 = vlaneseq
    %v701 = vshrl.u32 %v700, 7
    %v702 = vsub.s32 0, %v701
    %v703 = vrot.slane %v677, %v702
    %v704 = vlaneseq
    %v705 = vshrl.u32 %v704, 7
    %v706 = vsub.s32 1, %v705
    %v707 = vrot.slane %v677, %v706
    %v708 = vlaneseq
    %v709 = vshrl.u32 %v708, 7
    %v710 = vsub.s32 0, %v709
    %v711 = vrot.slane %v679, %v710
    %v712 = vlaneseq
    %v713 = vshrl.u32 %v712, 7
    %v714 = vsub.s32 1, %v713
    %v715 = vrot.slane %v679, %v714
    %v716 = vlaneseq
    %v717 = vshrl.u32 %v716, 7
    %v718 = vsub.s32 0, %v717
    %v719 = vrot.slane %v662, %v718
    %v720 = vlaneseq
    %v721 = vshrl.u32 %v720, 7
    %v722 = vsub.s32 1, %v721
    %v723 = vrot.slane %v662, %v722
    %v724 = vlaneseq
    %v725 = vshrl.u32 %v724, 7
    %v726 = vsub.s32 0, %v725
    %v727 = vrot.slane %v676, %v726
    %v728 = vlaneseq
    %v729 = vshrl.u32 %v728, 7
    %v730 = vsub.s32 1, %v729
    %v731 = vrot.slane %v676, %v730
    %v732 = vlaneseq
    %v733 = vshrl.u32 %v732, 7
    %v734 = vsub.s32 0, %v733
    %v735 = vrot.slane %v678, %v734
    %v736 = vlaneseq
    %v737 = vshrl.u32 %v736, 7
    %v738 = vsub.s32 1, %v737
    %v739 = vrot.slane %v678, %v738
    %v740 = vlaneseq
    %v741 = vshrl.u32 %v740, 7
    %v742 = vsub.s32 0, %v741
    %v743 = vrot.slane %v680, %v742
    %v744 = vlaneseq
    %v745 = vshrl.u32 %v744, 7
    %v746 = vsub.s32 1, %v745
    %v747 = vrot.slane %v680, %v746
    %765 = vset.pattern.permute.xlu0 0
    %766 = vperm.xlu0 %765, %v682
    %v767 = vpop.permute.xlu0 %766
    %770 = vset.pattern.permute.xlu0 0
    %771 = vperm.xlu0 %770, %v683
    %v772 = vpop.permute.xlu0 %771
    %v774 = vmul.f32 %v687, %v767
    %v775 = vmul.f32 %v691, %v767
    %v776 = vmul.f32 %v687, %v772
    %v777 = vmul.f32 %v691, %v772
    %v778 = vmul.f32 %v695, %v767
    %v779 = vmul.f32 %v699, %v767
    %v780 = vmul.f32 %v695, %v772
    %v781 = vmul.f32 %v699, %v772
    %v782 = vmul.f32 %v703, %v767
    %v783 = vmul.f32 %v707, %v767
    %v784 = vmul.f32 %v703, %v772
    %v785 = vmul.f32 %v707, %v772
    %v786 = vmul.f32 %v711, %v767
    %v787 = vmul.f32 %v715, %v767
    %v788 = vmul.f32 %v711, %v772
    %v789 = vmul.f32 %v715, %v772
    %v790 = vmul.f32 %v719, %v767
    %v791 = vmul.f32 %v723, %v767
    %v792 = vmul.f32 %v719, %v772
    %v793 = vmul.f32 %v723, %v772
    %v794 = vmul.f32 %v727, %v767
    %v795 = vmul.f32 %v731, %v767
    %v796 = vmul.f32 %v727, %v772
    %v797 = vmul.f32 %v731, %v772
    %v798 = vmul.f32 %v735, %v767
    %v799 = vmul.f32 %v739, %v767
    %v800 = vmul.f32 %v735, %v772
    %v801 = vmul.f32 %v739, %v772
    %v802 = vmul.f32 %v743, %v767
    %v803 = vmul.f32 %v747, %v767
    %v804 = vmul.f32 %v743, %v772
    %v805 = vmul.f32 %v747, %v772
    %v806 = vadd.f32 %v595, %v774
    %v807 = vadd.f32 %v596, %v775
    %v808 = vadd.f32 %v597, %v776
    %v809 = vadd.f32 %v598, %v777
    %v810 = vadd.f32 %v599, %v778
    %v811 = vadd.f32 %v600, %v779
    %v812 = vadd.f32 %v601, %v780
    %v813 = vadd.f32 %v602, %v781
    %v814 = vadd.f32 %v603, %v782
    %v815 = vadd.f32 %v604, %v783
    %v816 = vadd.f32 %v605, %v784
    %v817 = vadd.f32 %v606, %v785
    %v818 = vadd.f32 %v607, %v786
    %v819 = vadd.f32 %v608, %v787
    %v820 = vadd.f32 %v609, %v788
    %v821 = vadd.f32 %v610, %v789
    %v822 = vadd.f32 %v611, %v790
    %v823 = vadd.f32 %v612, %v791
    %v824 = vadd.f32 %v613, %v792
    %v825 = vadd.f32 %v614, %v793
    %v826 = vadd.f32 %v615, %v794
    %v827 = vadd.f32 %v616, %v795
    %v828 = vadd.f32 %v617, %v796
    %v829 = vadd.f32 %v618, %v797
    %v830 = vadd.f32 %v619, %v798
    %v831 = vadd.f32 %v620, %v799
    %v832 = vadd.f32 %v621, %v800
    %v833 = vadd.f32 %v622, %v801
    %v834 = vadd.f32 %v623, %v802
    %v835 = vadd.f32 %v624, %v803
    %v836 = vadd.f32 %v625, %v804
    %v837 = vadd.f32 %v626, %v805
    %v838 = vld [vmem:[%s2] sm:$0xff]
    %v839 = vld [vmem:[%s2 + $0x8] sm:$0xff]
    %841 = vset.pattern.permute.xlu0 0
    %842 = vperm.xlu0 %841, %v838
    %v843 = vpop.permute.xlu0 %842
    %846 = vset.pattern.permute.xlu0 0
    %847 = vperm.xlu0 %846, %v839
    %v848 = vpop.permute.xlu0 %847
    %v850 = vadd.f32 %v806, %v843
    %v851 = vadd.f32 %v807, %v843
    %v852 = vadd.f32 %v808, %v848
    %v853 = vadd.f32 %v809, %v848
    %v854 = vadd.f32 %v810, %v843
    %v855 = vadd.f32 %v811, %v843
    %v856 = vadd.f32 %v812, %v848
    %v857 = vadd.f32 %v813, %v848
    %v858 = vadd.f32 %v814, %v843
    %v859 = vadd.f32 %v815, %v843
    %v860 = vadd.f32 %v816, %v848
    %v861 = vadd.f32 %v817, %v848
    %v862 = vadd.f32 %v818, %v843
    %v863 = vadd.f32 %v819, %v843
    %v864 = vadd.f32 %v820, %v848
    %v865 = vadd.f32 %v821, %v848
    %v866 = vadd.f32 %v822, %v843
    %v867 = vadd.f32 %v823, %v843
    %v868 = vadd.f32 %v824, %v848
    %v869 = vadd.f32 %v825, %v848
    %v870 = vadd.f32 %v826, %v843
    %v871 = vadd.f32 %v827, %v843
    %v872 = vadd.f32 %v828, %v848
    %v873 = vadd.f32 %v829, %v848
    %v874 = vadd.f32 %v830, %v843
    %v875 = vadd.f32 %v831, %v843
    %v876 = vadd.f32 %v832, %v848
    %v877 = vadd.f32 %v833, %v848
    %v878 = vadd.f32 %v834, %v843
    %v879 = vadd.f32 %v835, %v843
    %v880 = vadd.f32 %v836, %v848
    %v881 = vadd.f32 %v837, %v848
    %v882 = vmax.f32 %v850, %v851
    %883 = vmax.xlane.f32.xlu0 %v882
    %v884 = vpop.xlane.xlu0 %883
    %v885 = vmax.f32 %v852, %v853
    %886 = vmax.xlane.f32.xlu0 %v885
    %v887 = vpop.xlane.xlu0 %886
    %v888 = vmax.f32 %v854, %v855
    %889 = vmax.xlane.f32.xlu0 %v888
    %v890 = vpop.xlane.xlu0 %889
    %v891 = vmax.f32 %v856, %v857
    %892 = vmax.xlane.f32.xlu0 %v891
    %v893 = vpop.xlane.xlu0 %892
    %v894 = vmax.f32 %v858, %v859
    %895 = vmax.xlane.f32.xlu0 %v894
    %v896 = vpop.xlane.xlu0 %895
    %v897 = vmax.f32 %v860, %v861
    %898 = vmax.xlane.f32.xlu0 %v897
    %v899 = vpop.xlane.xlu0 %898
    %v900 = vmax.f32 %v862, %v863
    %901 = vmax.xlane.f32.xlu0 %v900
    %v902 = vpop.xlane.xlu0 %901
    %v903 = vmax.f32 %v864, %v865
    %904 = vmax.xlane.f32.xlu0 %v903
    %v905 = vpop.xlane.xlu0 %904
    %v906 = vmax.f32 %v866, %v867
    %907 = vmax.xlane.f32.xlu0 %v906
    %v908 = vpop.xlane.xlu0 %907
    %v909 = vmax.f32 %v868, %v869
    %910 = vmax.xlane.f32.xlu0 %v909
    %v911 = vpop.xlane.xlu0 %910
    %v912 = vmax.f32 %v870, %v871
    %913 = vmax.xlane.f32.xlu0 %v912
    %v914 = vpop.xlane.xlu0 %913
    %v915 = vmax.f32 %v872, %v873
    %916 = vmax.xlane.f32.xlu0 %v915
    %v917 = vpop.xlane.xlu0 %916
    %v918 = vmax.f32 %v874, %v875
    %919 = vmax.xlane.f32.xlu0 %v918
    %v920 = vpop.xlane.xlu0 %919
    %v921 = vmax.f32 %v876, %v877
    %922 = vmax.xlane.f32.xlu0 %v921
    %v923 = vpop.xlane.xlu0 %922
    %v924 = vmax.f32 %v878, %v879
    %925 = vmax.xlane.f32.xlu0 %v924
    %v926 = vpop.xlane.xlu0 %925
    %v927 = vmax.f32 %v880, %v881
    %928 = vmax.xlane.f32.xlu0 %v927
    %v929 = vpop.xlane.xlu0 %928
    %v930 = vsub.f32 %v850, %v884
    %v931 = vsub.f32 %v851, %v884
    %v932 = vsub.f32 %v852, %v887
    %v933 = vsub.f32 %v853, %v887
    %v934 = vsub.f32 %v854, %v890
    %v935 = vsub.f32 %v855, %v890
    %v936 = vsub.f32 %v856, %v893
    %v937 = vsub.f32 %v857, %v893
    %v938 = vsub.f32 %v858, %v896
    %v939 = vsub.f32 %v859, %v896
    %v940 = vsub.f32 %v860, %v899
    %v941 = vsub.f32 %v861, %v899
    %v942 = vsub.f32 %v862, %v902
    %v943 = vsub.f32 %v863, %v902
    %v944 = vsub.f32 %v864, %v905
    %v945 = vsub.f32 %v865, %v905
    %v946 = vsub.f32 %v866, %v908
    %v947 = vsub.f32 %v867, %v908
    %v948 = vsub.f32 %v868, %v911
    %v949 = vsub.f32 %v869, %v911
    %v950 = vsub.f32 %v870, %v914
    %v951 = vsub.f32 %v871, %v914
    %v952 = vsub.f32 %v872, %v917
    %v953 = vsub.f32 %v873, %v917
    %v954 = vsub.f32 %v874, %v920
    %v955 = vsub.f32 %v875, %v920
    %v956 = vsub.f32 %v876, %v923
    %v957 = vsub.f32 %v877, %v923
    %v958 = vsub.f32 %v878, %v926
    %v959 = vsub.f32 %v879, %v926
    %v960 = vsub.f32 %v880, %v929
    %v961 = vsub.f32 %v881, %v929
    %v962 = vmul.f32 %v930, 1.442695
    %v963 = vpow.pop %v962
    %v964 = vmul.f32 %v931, 1.442695
    %v965 = vpow.pop %v964
    %v966 = vmul.f32 %v932, 1.442695
    %v967 = vpow.pop %v966
    %v968 = vmul.f32 %v933, 1.442695
    %v969 = vpow.pop %v968
    %v970 = vmul.f32 %v934, 1.442695
    %v971 = vpow.pop %v970
    %v972 = vmul.f32 %v935, 1.442695
    %v973 = vpow.pop %v972
    %v974 = vmul.f32 %v936, 1.442695
    %v975 = vpow.pop %v974
    %v976 = vmul.f32 %v937, 1.442695
    %v977 = vpow.pop %v976
    %v978 = vmul.f32 %v938, 1.442695
    %v979 = vpow.pop %v978
    %v980 = vmul.f32 %v939, 1.442695
    %v981 = vpow.pop %v980
    %v982 = vmul.f32 %v940, 1.442695
    %v983 = vpow.pop %v982
    %v984 = vmul.f32 %v941, 1.442695
    %v985 = vpow.pop %v984
    %v986 = vmul.f32 %v942, 1.442695
    %v987 = vpow.pop %v986
    %v988 = vmul.f32 %v943, 1.442695
    %v989 = vpow.pop %v988
    %v990 = vmul.f32 %v944, 1.442695
    %v991 = vpow.pop %v990
    %v992 = vmul.f32 %v945, 1.442695
    %v993 = vpow.pop %v992
    %v994 = vmul.f32 %v946, 1.442695
    %v995 = vpow.pop %v994
    %v996 = vmul.f32 %v947, 1.442695
    %v997 = vpow.pop %v996
    %v998 = vmul.f32 %v948, 1.442695
    %v999 = vpow.pop %v998
    %v1000 = vmul.f32 %v949, 1.442695
    %v1001 = vpow.pop %v1000
    %v1002 = vmul.f32 %v950, 1.442695
    %v1003 = vpow.pop %v1002
    %v1004 = vmul.f32 %v951, 1.442695
    %v1005 = vpow.pop %v1004
    %v1006 = vmul.f32 %v952, 1.442695
    %v1007 = vpow.pop %v1006
    %v1008 = vmul.f32 %v953, 1.442695
    %v1009 = vpow.pop %v1008
    %v1010 = vmul.f32 %v954, 1.442695
    %v1011 = vpow.pop %v1010
    %v1012 = vmul.f32 %v955, 1.442695
    %v1013 = vpow.pop %v1012
    %v1014 = vmul.f32 %v956, 1.442695
    %v1015 = vpow.pop %v1014
    %v1016 = vmul.f32 %v957, 1.442695
    %v1017 = vpow.pop %v1016
    %v1018 = vmul.f32 %v958, 1.442695
    %v1019 = vpow.pop %v1018
    %v1020 = vmul.f32 %v959, 1.442695
    %v1021 = vpow.pop %v1020
    %v1022 = vmul.f32 %v960, 1.442695
    %v1023 = vpow.pop %v1022
    %v1024 = vmul.f32 %v961, 1.442695
    %v1025 = vpow.pop %v1024
    %v1026 = vld [vmem:[%s3] sm:$0xff]
    %v1027 = vld [vmem:[%s3 + $0x8] sm:$0xff]
    %v1028 = vld [vmem:[%s3 + $0x10] sm:$0xff]
    %v1029 = vld [vmem:[%s3 + $0x18] sm:$0xff]
    %v1030 = vld [vmem:[%s3 + $0x20] sm:$0xff]
    %v1031 = vld [vmem:[%s3 + $0x28] sm:$0xff]
    %v1032 = vld [vmem:[%s3 + $0x30] sm:$0xff]
    %v1033 = vld [vmem:[%s3 + $0x38] sm:$0xff]
    %v1034 = vld [vmem:[%s3 + $0x40] sm:$0xff]
    %v1035 = vld [vmem:[%s3 + $0x48] sm:$0xff]
    %v1036 = vld [vmem:[%s3 + $0x50] sm:$0xff]
    %v1037 = vld [vmem:[%s3 + $0x58] sm:$0xff]
    %v1038 = vld [vmem:[%s3 + $0x60] sm:$0xff]
    %v1039 = vld [vmem:[%s3 + $0x68] sm:$0xff]
    %v1040 = vld [vmem:[%s3 + $0x70] sm:$0xff]
    %v1041 = vld [vmem:[%s3 + $0x78] sm:$0xff]
    %v1042 = vld [vmem:[%s3 + $0x80] sm:$0xff]
    %v1043 = vld [vmem:[%s3 + $0x88] sm:$0xff]
    %v1044 = vld [vmem:[%s3 + $0x90] sm:$0xff]
    %v1045 = vld [vmem:[%s3 + $0x98] sm:$0xff]
    %v1046 = vld [vmem:[%s3 + $0xa0] sm:$0xff]
    %v1047 = vld [vmem:[%s3 + $0xa8] sm:$0xff]
    %v1048 = vld [vmem:[%s3 + $0xb0] sm:$0xff]
    %v1049 = vld [vmem:[%s3 + $0xb8] sm:$0xff]
    %v1050 = vld [vmem:[%s3 + $0xc0] sm:$0xff]
    %v1051 = vld [vmem:[%s3 + $0xc8] sm:$0xff]
    %v1052 = vld [vmem:[%s3 + $0xd0] sm:$0xff]
    %v1053 = vld [vmem:[%s3 + $0xd8] sm:$0xff]
    %v1054 = vld [vmem:[%s3 + $0xe0] sm:$0xff]
    %v1055 = vld [vmem:[%s3 + $0xe8] sm:$0xff]
    %v1056 = vld [vmem:[%s3 + $0xf0] sm:$0xff]
    %v1057 = vld [vmem:[%s3 + $0xf8] sm:$0xff]
    %1058 = vmatprep.subr.mxu0 0.0
    %1059 = vmatpush1.msra.mxu0 %v1026
    %1060 = vmatprep.subr.mxu0 0.0
    %1061 = vmatpush1.msra.mxu0 %v1027
    %1062 = vmatprep.subr.mxu0 0.0
    %1063 = vmatpush1.msra.mxu0 %v1028
    %1064 = vmatprep.subr.mxu0 0.0
    %1065 = vmatpush1.msra.mxu0 %v1029
    %1066 = vmatprep.subr.mxu0 0.0
    %1067 = vmatpush1.msra.mxu0 %v1030
    %1068 = vmatprep.subr.mxu0 0.0
    %1069 = vmatpush1.msra.mxu0 %v1031
    %1070 = vmatprep.subr.mxu0 0.0
    %1071 = vmatpush1.msra.mxu0 %v1032
    %1072 = vmatprep.subr.mxu0 0.0
    %1073 = vmatpush1.msra.mxu0 %v1033
    %1074 = vmatprep.subr.mxu0 0.0
    %1075 = vmatpush1.msra.mxu0 %v1034
    %1076 = vmatprep.subr.mxu0 0.0
    %1077 = vmatpush1.msra.mxu0 %v1035
    %1078 = vmatprep.subr.mxu0 0.0
    %1079 = vmatpush1.msra.mxu0 %v1036
    %1080 = vmatprep.subr.mxu0 0.0
    %1081 = vmatpush1.msra.mxu0 %v1037
    %1082 = vmatprep.subr.mxu0 0.0
    %1083 = vmatpush1.msra.mxu0 %v1038
    %1084 = vmatprep.subr.mxu0 0.0
    %1085 = vmatpush1.msra.mxu0 %v1039
    %1086 = vmatprep.subr.mxu0 0.0
    %1087 = vmatpush1.msra.mxu0 %v1040
    %1088 = vmatprep.subr.mxu0 0.0
    %1089 = vmatpush1.msra.mxu0 %v1041
    %1090 = vmatprep.subr.mxu0 0.0
    %1091 = vmatpush1.msra.mxu0 %v1042
    %1092 = vmatprep.subr.mxu0 0.0
    %1093 = vmatpush1.msra.mxu0 %v1043
    %1094 = vmatprep.subr.mxu0 0.0
    %1095 = vmatpush1.msra.mxu0 %v1044
    %1096 = vmatprep.subr.mxu0 0.0
    %1097 = vmatpush1.msra.mxu0 %v1045
    %1098 = vmatprep.subr.mxu0 0.0
    %1099 = vmatpush1.msra.mxu0 %v1046
    %1100 = vmatprep.subr.mxu0 0.0
    %1101 = vmatpush1.msra.mxu0 %v1047
    %1102 = vmatprep.subr.mxu0 0.0
    %1103 = vmatpush1.msra.mxu0 %v1048
    %1104 = vmatprep.subr.mxu0 0.0
    %1105 = vmatpush1.msra.mxu0 %v1049
    %1106 = vmatprep.subr.mxu0 0.0
    %1107 = vmatpush1.msra.mxu0 %v1050
    %1108 = vmatprep.subr.mxu0 0.0
    %1109 = vmatpush1.msra.mxu0 %v1051
    %1110 = vmatprep.subr.mxu0 0.0
    %1111 = vmatpush1.msra.mxu0 %v1052
    %1112 = vmatprep.subr.mxu0 0.0
    %1113 = vmatpush1.msra.mxu0 %v1053
    %1114 = vmatprep.subr.mxu0 0.0
    %1115 = vmatpush1.msra.mxu0 %v1054
    %1116 = vmatprep.subr.mxu0 0.0
    %1117 = vmatpush1.msra.mxu0 %v1055
    %1118 = vmatprep.subr.mxu0 0.0
    %1119 = vmatpush1.msra.mxu0 %v1056
    %1120 = vmatprep.subr.mxu0 0.0
    %1121 = vmatpush1.msra.mxu0 %v1057
    %1122 = vmatprep.mubr.f32.mxu0 %v965
    %1123 = vmatmul.mubr.f32.gmra.mrb[0].mxu0 %v963
    %v1124 = vpop.f32.mrb[0].mxu0
    %v1125 = vadd.f32 0.0, %v1124
    %v1126 = vpop.f32.mrb[0].mxu0
    %1127 = vmatprep.mubr.f32.mxu0 %v969
    %1128 = vmatmul.mubr.f32.gmra.mrb[0].mxu0 %v967
    %v1129 = vpop.f32.mrb[0].mxu0
    %v1130 = vadd.f32 0.0, %v1129
    %v1131 = vpop.f32.mrb[0].mxu0
    %1132 = vmatprep.mubr.f32.mxu0 %v973
    %1133 = vmatmul.mubr.f32.gmra.mrb[0].mxu0 %v971
    %v1134 = vpop.f32.mrb[0].mxu0
    %v1135 = vadd.f32 0.0, %v1134
    %v1136 = vpop.f32.mrb[0].mxu0
    %1137 = vmatprep.mubr.f32.mxu0 %v977
    %1138 = vmatmul.mubr.f32.gmra.mrb[0].mxu0 %v975
    %v1139 = vpop.f32.mrb[0].mxu0
    %v1140 = vadd.f32 0.0, %v1139
    %v1141 = vpop.f32.mrb[0].mxu0
    %1142 = vmatprep.mubr.f32.mxu0 %v981
    %1143 = vmatmul.mubr.f32.gmra.mrb[0].mxu0 %v979
    %v1144 = vpop.f32.mrb[0].mxu0
    %v1145 = vadd.f32 0.0, %v1144
    %v1146 = vpop.f32.mrb[0].mxu0
    %1147 = vmatprep.mubr.f32.mxu0 %v985
    %1148 = vmatmul.mubr.f32.gmra.mrb[0].mxu0 %v983
    %v1149 = vpop.f32.mrb[0].mxu0
    %v1150 = vadd.f32 0.0, %v1149
    %v1151 = vpop.f32.mrb[0].mxu0
    %1152 = vmatprep.mubr.f32.mxu0 %v989
    %1153 = vmatmul.mubr.f32.gmra.mrb[0].mxu0 %v987
    %v1154 = vpop.f32.mrb[0].mxu0
    %v1155 = vadd.f32 0.0, %v1154
    %v1156 = vpop.f32.mrb[0].mxu0
    %1157 = vmatprep.mubr.f32.mxu0 %v993
    %1158 = vmatmul.mubr.f32.gmra.mrb[0].mxu0 %v991
    %v1159 = vpop.f32.mrb[0].mxu0
    %v1160 = vadd.f32 0.0, %v1159
    %v1161 = vpop.f32.mrb[0].mxu0
    %1162 = vmatprep.mubr.f32.mxu0 %v997
    %1163 = vmatmul.mubr.f32.gmra.mrb[0].mxu0 %v995
    %v1164 = vpop.f32.mrb[0].mxu0
    %v1165 = vadd.f32 0.0, %v1164
    %v1166 = vpop.f32.mrb[0].mxu0
    %1167 = vmatprep.mubr.f32.mxu0 %v1001
    %1168 = vmatmul.mubr.f32.gmra.mrb[0].mxu0 %v999
    %v1169 = vpop.f32.mrb[0].mxu0
    %v1170 = vadd.f32 0.0, %v1169
    %v1171 = vpop.f32.mrb[0].mxu0
    %1172 = vmatprep.mubr.f32.mxu0 %v1005
    %1173 = vmatmul.mubr.f32.gmra.mrb[0].mxu0 %v1003
    %v1174 = vpop.f32.mrb[0].mxu0
    %v1175 = vadd.f32 0.0, %v1174
    %v1176 = vpop.f32.mrb[0].mxu0
    %1177 = vmatprep.mubr.f32.mxu0 %v1009
    %1178 = vmatmul.mubr.f32.gmra.mrb[0].mxu0 %v1007
    %v1179 = vpop.f32.mrb[0].mxu0
    %v1180 = vadd.f32 0.0, %v1179
    %v1181 = vpop.f32.mrb[0].mxu0
    %1182 = vmatprep.mubr.f32.mxu0 %v1013
    %1183 = vmatmul.mubr.f32.gmra.mrb[0].mxu0 %v1011
    %v1184 = vpop.f32.mrb[0].mxu0
    %v1185 = vadd.f32 0.0, %v1184
    %v1186 = vpop.f32.mrb[0].mxu0
    %1187 = vmatprep.mubr.f32.mxu0 %v1017
    %1188 = vmatmul.mubr.f32.gmra.mrb[0].mxu0 %v1015
    %v1189 = vpop.f32.mrb[0].mxu0
    %v1190 = vadd.f32 0.0, %v1189
    %v1191 = vpop.f32.mrb[0].mxu0
    %1192 = vmatprep.mubr.f32.mxu0 %v1021
    %1193 = vmatmul.mubr.f32.gmra.mrb[0].mxu0 %v1019
    %v1194 = vpop.f32.mrb[0].mxu0
    %v1195 = vadd.f32 0.0, %v1194
    %v1196 = vpop.f32.mrb[0].mxu0
    %1197 = vmatprep.mubr.f32.mxu0 %v1025
    %1198 = vmatmul.mubr.f32.gmra.mrb[0].mxu0 %v1023
    %v1199 = vpop.f32.mrb[0].mxu0
    %v1200 = vadd.f32 0.0, %v1199
    %v1201 = vpop.f32.mrb[0].mxu0
    %1202 = vdwg.mxu0
    %v1203 = vld [vmem:[%s4] sm:$0xff]
    %v1204 = vld [vmem:[%s4 + $0x8] sm:$0xff]
    %v1205 = vmul.f32 %v1125, %v1203
    %v1206 = vmul.f32 %v1130, %v1204
    %v1207 = vmul.f32 %v1135, %v1203
    %v1208 = vmul.f32 %v1140, %v1204
    %v1209 = vmul.f32 %v1145, %v1203
    %v1210 = vmul.f32 %v1150, %v1204
    %v1211 = vmul.f32 %v1155, %v1203
    %v1212 = vmul.f32 %v1160, %v1204
    %v1213 = vmul.f32 %v1165, %v1203
    %v1214 = vmul.f32 %v1170, %v1204
    %v1215 = vmul.f32 %v1175, %v1203
    %v1216 = vmul.f32 %v1180, %v1204
    %v1217 = vmul.f32 %v1185, %v1203
    %v1218 = vmul.f32 %v1190, %v1204
    %v1219 = vmul.f32 %v1195, %v1203
    %v1220 = vmul.f32 %v1200, %v1204
    %vm1221 = vcmask 392192
    %v1222 = vsel %vm1221, %v1205, 0.0
    %v1223 = vsel %vm1221, %v1206, 0.0
    %v1224 = vadd.f32 %v1222, %v1223
    %v1225 = vrot.slane %v1224, 4
    %v1226 = vadd.f32 %v1224, %v1225
    %v1227 = vrot.slane %v1226, 2
    %v1228 = vadd.f32 %v1226, %v1227
    %v1229 = vrot.slane %v1228, 1
    %v1230 = vadd.f32 %v1228, %v1229
    %v1231 = vsel %vm1221, %v1207, 0.0
    %v1232 = vsel %vm1221, %v1208, 0.0
    %v1233 = vadd.f32 %v1231, %v1232
    %v1234 = vrot.slane %v1233, 4
    %v1235 = vadd.f32 %v1233, %v1234
    %v1236 = vrot.slane %v1235, 2
    %v1237 = vadd.f32 %v1235, %v1236
    %v1238 = vrot.slane %v1237, 1
    %v1239 = vadd.f32 %v1237, %v1238
    %v1240 = vsel %vm1221, %v1209, 0.0
    %v1241 = vsel %vm1221, %v1210, 0.0
    %v1242 = vadd.f32 %v1240, %v1241
    %v1243 = vrot.slane %v1242, 4
    %v1244 = vadd.f32 %v1242, %v1243
    %v1245 = vrot.slane %v1244, 2
    %v1246 = vadd.f32 %v1244, %v1245
    %v1247 = vrot.slane %v1246, 1
    %v1248 = vadd.f32 %v1246, %v1247
    %v1249 = vsel %vm1221, %v1211, 0.0
    %v1250 = vsel %vm1221, %v1212, 0.0
    %v1251 = vadd.f32 %v1249, %v1250
    %v1252 = vrot.slane %v1251, 4
    %v1253 = vadd.f32 %v1251, %v1252
    %v1254 = vrot.slane %v1253, 2
    %v1255 = vadd.f32 %v1253, %v1254
    %v1256 = vrot.slane %v1255, 1
    %v1257 = vadd.f32 %v1255, %v1256
    %v1258 = vsel %vm1221, %v1213, 0.0
    %v1259 = vsel %vm1221, %v1214, 0.0
    %v1260 = vadd.f32 %v1258, %v1259
    %v1261 = vrot.slane %v1260, 4
    %v1262 = vadd.f32 %v1260, %v1261
    %v1263 = vrot.slane %v1262, 2
    %v1264 = vadd.f32 %v1262, %v1263
    %v1265 = vrot.slane %v1264, 1
    %v1266 = vadd.f32 %v1264, %v1265
    %v1267 = vsel %vm1221, %v1215, 0.0
    %v1268 = vsel %vm1221, %v1216, 0.0
    %v1269 = vadd.f32 %v1267, %v1268
    %v1270 = vrot.slane %v1269, 4
    %v1271 = vadd.f32 %v1269, %v1270
    %v1272 = vrot.slane %v1271, 2
    %v1273 = vadd.f32 %v1271, %v1272
    %v1274 = vrot.slane %v1273, 1
    %v1275 = vadd.f32 %v1273, %v1274
    %v1276 = vsel %vm1221, %v1217, 0.0
    %v1277 = vsel %vm1221, %v1218, 0.0
    %v1278 = vadd.f32 %v1276, %v1277
    %v1279 = vrot.slane %v1278, 4
    %v1280 = vadd.f32 %v1278, %v1279
    %v1281 = vrot.slane %v1280, 2
    %v1282 = vadd.f32 %v1280, %v1281
    %v1283 = vrot.slane %v1282, 1
    %v1284 = vadd.f32 %v1282, %v1283
    %v1285 = vsel %vm1221, %v1219, 0.0
    %v1286 = vsel %vm1221, %v1220, 0.0
    %v1287 = vadd.f32 %v1285, %v1286
    %v1288 = vrot.slane %v1287, 4
    %v1289 = vadd.f32 %v1287, %v1288
    %v1290 = vrot.slane %v1289, 2
    %v1291 = vadd.f32 %v1289, %v1290
    %v1292 = vrot.slane %v1291, 1
    %v1293 = vadd.f32 %v1291, %v1292
    %v1294 = vrcp.pop %v1230
    %v1295 = vmul.f32 1.0, %v1294
    %v1296 = vrcp.pop %v1239
    %v1297 = vmul.f32 1.0, %v1296
    %v1298 = vrcp.pop %v1248
    %v1299 = vmul.f32 1.0, %v1298
    %v1300 = vrcp.pop %v1257
    %v1301 = vmul.f32 1.0, %v1300
    %v1302 = vrcp.pop %v1266
    %v1303 = vmul.f32 1.0, %v1302
    %v1304 = vrcp.pop %v1275
    %v1305 = vmul.f32 1.0, %v1304
    %v1306 = vrcp.pop %v1284
    %v1307 = vmul.f32 1.0, %v1306
    %v1308 = vrcp.pop %v1293
    %v1309 = vmul.f32 1.0, %v1308
    %1318 = vrot.lane.b32.xlu0 %v1295, 16
    %v1319 = vpop.permute.xlu0 %1318
    %1320 = vrot.lane.b32.xlu0 %v1297, 16
    %v1321 = vpop.permute.xlu0 %1320
    %1322 = vrot.lane.b32.xlu0 %v1299, 16
    %v1323 = vpop.permute.xlu0 %1322
    %1324 = vrot.lane.b32.xlu0 %v1301, 16
    %v1325 = vpop.permute.xlu0 %1324
    %1326 = vrot.lane.b32.xlu0 %v1303, 16
    %v1327 = vpop.permute.xlu0 %1326
    %1328 = vrot.lane.b32.xlu0 %v1305, 16
    %v1329 = vpop.permute.xlu0 %1328
    %1330 = vrot.lane.b32.xlu0 %v1307, 16
    %v1331 = vpop.permute.xlu0 %1330
    %1332 = vrot.lane.b32.xlu0 %v1309, 16
    %v1333 = vpop.permute.xlu0 %1332
    %v1342 = vmul.f32 %v1230, %v1319
    %v1343 = vmul.f32 %v1239, %v1321
    %v1344 = vmul.f32 %v1248, %v1323
    %v1345 = vmul.f32 %v1257, %v1325
    %v1346 = vmul.f32 %v1266, %v1327
    %v1347 = vmul.f32 %v1275, %v1329
    %v1348 = vmul.f32 %v1284, %v1331
    %v1349 = vmul.f32 %v1293, %v1333
    %1350 = vrot.lane.b32.xlu0 %v1295, 32
    %v1351 = vpop.permute.xlu0 %1350
    %1352 = vrot.lane.b32.xlu0 %v1297, 32
    %v1353 = vpop.permute.xlu0 %1352
    %1354 = vrot.lane.b32.xlu0 %v1299, 32
    %v1355 = vpop.permute.xlu0 %1354
    %1356 = vrot.lane.b32.xlu0 %v1301, 32
    %v1357 = vpop.permute.xlu0 %1356
    %1358 = vrot.lane.b32.xlu0 %v1303, 32
    %v1359 = vpop.permute.xlu0 %1358
    %1360 = vrot.lane.b32.xlu0 %v1305, 32
    %v1361 = vpop.permute.xlu0 %1360
    %1362 = vrot.lane.b32.xlu0 %v1307, 32
    %v1363 = vpop.permute.xlu0 %1362
    %1364 = vrot.lane.b32.xlu0 %v1309, 32
    %v1365 = vpop.permute.xlu0 %1364
    %v1374 = vmul.f32 %v1230, %v1351
    %v1375 = vmul.f32 %v1239, %v1353
    %v1376 = vmul.f32 %v1248, %v1355
    %v1377 = vmul.f32 %v1257, %v1357
    %v1378 = vmul.f32 %v1266, %v1359
    %v1379 = vmul.f32 %v1275, %v1361
    %v1380 = vmul.f32 %v1284, %v1363
    %v1381 = vmul.f32 %v1293, %v1365
    %v1390 = vrot.slane %v1343, 7
    %vm1391 = vcmask 1041409
    %v1392 = vsel %vm1391, %v1390, %v1342
    %v1393 = vrot.slane %v1344, 6
    %vm1394 = vcmask 1042434
    %v1395 = vsel %vm1394, %v1393, %v1392
    %v1396 = vrot.slane %v1345, 5
    %vm1397 = vcmask 1043459
    %v1398 = vsel %vm1397, %v1396, %v1395
    %v1399 = vrot.slane %v1346, 4
    %vm1400 = vcmask 1044484
    %v1401 = vsel %vm1400, %v1399, %v1398
    %v1402 = vrot.slane %v1347, 3
    %vm1403 = vcmask 1045509
    %v1404 = vsel %vm1403, %v1402, %v1401
    %v1405 = vrot.slane %v1348, 2
    %vm1406 = vcmask 1046534
    %v1407 = vsel %vm1406, %v1405, %v1404
    %v1408 = vrot.slane %v1349, 1
    %vm1409 = vcmask 1047559
    %v1410 = vsel %vm1409, %v1408, %v1407
    %1411 = vrot.lane.b32.xlu0 %v1410, 112
    %v1412 = vpop.permute.xlu0 %1411
    %v1422 = vrot.slane %v1375, 7
    %v1423 = vsel %vm1391, %v1422, %v1374
    %v1424 = vrot.slane %v1376, 6
    %v1425 = vsel %vm1394, %v1424, %v1423
    %v1426 = vrot.slane %v1377, 5
    %v1427 = vsel %vm1397, %v1426, %v1425
    %v1428 = vrot.slane %v1378, 4
    %v1429 = vsel %vm1400, %v1428, %v1427
    %v1430 = vrot.slane %v1379, 3
    %v1431 = vsel %vm1403, %v1430, %v1429
    %v1432 = vrot.slane %v1380, 2
    %v1433 = vsel %vm1406, %v1432, %v1431
    %v1434 = vrot.slane %v1381, 1
    %v1435 = vsel %vm1409, %v1434, %v1433
    %1436 = vrot.lane.b32.xlu0 %v1435, 112
    %v1437 = vpop.permute.xlu0 %1436
    %vm1439 = vcmask 130048
    %v1440 = vsel %vm1439, %v1412, %v1437
    %v1441 = vld [vmem:[%s5] sm:$0xff]
    %v1442 = vld [vmem:[%s5 + $0x8] sm:$0xff]
    %v1443 = vld [vmem:[%s5 + $0x10] sm:$0xff]
    %v1444 = vld [vmem:[%s5 + $0x18] sm:$0xff]
    %v1445 = vld [vmem:[%s6] sm:$0x1]
    %v1447 = vlaneseq
    %v1448 = vshrl.u32 %v1447, 7
    %v1449 = vsub.s32 0, %v1448
    %v1450 = vrot.slane %v1445, %v1449
    %vm1452 = vcmask 261120
    %v1454 = vsel %vm1452, %v1440, 0
    %1456 = vmatprep.subr.mxu0 0.0
    %1457 = vmatpush1.msra.mxu0 %v1441
    %1458 = vmatprep.subr.mxu0 0.0
    %1459 = vmatpush1.msra.mxu0 %v1442
    %1460 = vmatprep.subr.mxu0 0.0
    %1461 = vmatpush1.msra.mxu0 %v1443
    %1462 = vmatprep.subr.mxu0 0.0
    %1463 = vmatpush1.msra.mxu0 %v1444
    %1464 = vmatprep.subr.mxu0 0.0
    %1465 = vmatpush1.msra.mxu0 0.0
    %1466 = vmatprep.subr.mxu0 0.0
    %1467 = vmatpush1.msra.mxu0 0.0
    %1468 = vmatprep.subr.mxu0 0.0
    %1469 = vmatpush1.msra.mxu0 0.0
    %1470 = vmatprep.subr.mxu0 0.0
    %1471 = vmatpush1.msra.mxu0 0.0
    %1472 = vmatprep.subr.mxu0 0.0
    %1473 = vmatpush1.msra.mxu0 0.0
    %1474 = vmatprep.subr.mxu0 0.0
    %1475 = vmatpush1.msra.mxu0 0.0
    %1476 = vmatprep.subr.mxu0 0.0
    %1477 = vmatpush1.msra.mxu0 0.0
    %1478 = vmatprep.subr.mxu0 0.0
    %1479 = vmatpush1.msra.mxu0 0.0
    %1480 = vmatprep.subr.mxu0 0.0
    %1481 = vmatpush1.msra.mxu0 0.0
    %1482 = vmatprep.subr.mxu0 0.0
    %1483 = vmatpush1.msra.mxu0 0.0
    %1484 = vmatprep.subr.mxu0 0.0
    %1485 = vmatpush1.msra.mxu0 0.0
    %1486 = vmatprep.subr.mxu0 0.0
    %1487 = vmatpush1.msra.mxu0 0.0
    %1488 = vmatprep.subr.mxu0 0.0
    %1489 = vmatpush1.msra.mxu0 0.0
    %1490 = vmatprep.subr.mxu0 0.0
    %1491 = vmatpush1.msra.mxu0 0.0
    %1492 = vmatprep.subr.mxu0 0.0
    %1493 = vmatpush1.msra.mxu0 0.0
    %1494 = vmatprep.subr.mxu0 0.0
    %1495 = vmatpush1.msra.mxu0 0.0
    %1496 = vmatprep.subr.mxu0 0.0
    %1497 = vmatpush1.msra.mxu0 0.0
    %1498 = vmatprep.subr.mxu0 0.0
    %1499 = vmatpush1.msra.mxu0 0.0
    %1500 = vmatprep.subr.mxu0 0.0
    %1501 = vmatpush1.msra.mxu0 0.0
    %1502 = vmatprep.subr.mxu0 0.0
    %1503 = vmatpush1.msra.mxu0 0.0
    %1504 = vmatprep.subr.mxu0 0.0
    %1505 = vmatpush1.msra.mxu0 0.0
    %1506 = vmatprep.subr.mxu0 0.0
    %1507 = vmatpush1.msra.mxu0 0.0
    %1508 = vmatprep.subr.mxu0 0.0
    %1509 = vmatpush1.msra.mxu0 0.0
    %1510 = vmatprep.subr.mxu0 0.0
    %1511 = vmatpush1.msra.mxu0 0.0
    %1512 = vmatprep.subr.mxu0 0.0
    %1513 = vmatpush1.msra.mxu0 0.0
    %1514 = vmatprep.subr.mxu0 0.0
    %1515 = vmatpush1.msra.mxu0 0.0
    %1516 = vmatprep.subr.mxu0 0.0
    %1517 = vmatpush1.msra.mxu0 0.0
    %1518 = vmatprep.subr.mxu0 0.0
    %1519 = vmatpush1.msra.mxu0 0.0
    %1520 = vmatprep.mubr.f32.mxu0 0.0
    %1521 = vmatmul.mubr.f32.gmra.mrb[0].mxu0 %v1454
    %v1522 = vpop.f32.mrb[0].mxu0
    %v1523 = vadd.f32 %v1450, %v1522
    %v1524 = vpop.f32.mrb[0].mxu0
    %1525 = vdwg.mxu0
    %1526 = vst.msk [vmem:[#allocation2] sm:$0xff] %vm1452, %v1523
    // Predicated region
    $region30: #{tpu_custom_call.1} parent=1 // pred_check
      _
    $region31: #{tpu_custom_call.1} parent=1 // pred_check_branch
      %1528 = sbr.rel (0) target = $region33
    $region32: #{tpu_custom_call.1} parent=1 // pred_region
      %s1530 = ssub.s32 128, 128
      %1531 = vsyncadd [#allocation3], %s1530
      %s1533 = sshll.u32 [#allocation2], 4
      %s1534 = int_to_ptr.vmem [resolvable:$true] %s1533
      %1536 = dma.vmem_to_hbm [thread:$0]  %s1534, 128, %s7, [#allocation3]
    $region33: #{tpu_custom_call.1} parent=1 // pred_fallthru
      _
    // Predicated region
    $region34: #{tpu_custom_call.1} parent=1 // pred_check
      _
    $region35: #{tpu_custom_call.1} parent=1 // pred_check_branch
      %1538 = sbr.rel (0) target = $region37
    $region36: #{tpu_custom_call.1} parent=1 // pred_region
      %1539 = dma.done [#allocation3], 128
    $region37: #{tpu_custom_call.1} parent=1 // pred_fallthru
      _
    %1540 = vsyncpa [#allocation3], 1

</llo_original>
